<compile_context>
chip_gen: v7x
topology: tpu7x:2x2x1
jax: 0.10.0
libtpu: 0.0.40
codegen_flags: <defaults>
</compile_context>

<pallas_src>
import jax
import jax.numpy as jnp
from jax.experimental import pallas as pl
from jax.experimental.pallas import tpu as pltpu


def _critic_kernel(xT_ref, w1_ref, b1_ref, w2_ref, b2_ref, q_ref):
    # Per grid step (TB = batch tile, batch on the lane axis):
    #   xT_ref: [D, TB] bf16      w1_ref: [F, D] bf16
    #   b1_ref: [F, 1]  f32       w2_ref: [F, 1] f32      b2_ref: [1, 1] f32
    #   q_ref:  [1, TB] f32
    # First layer, transposed: hT = W1 @ x^T  -> [F, TB], f32 accumulation.
    hT = jnp.dot(w1_ref[...], xT_ref[...], preferred_element_type=jnp.float32)
    # Bias + ReLU in f32 on the accumulator.
    hT = jnp.maximum(hT + b1_ref[...], 0.0)
    # Second layer (out_features == 1): VPU multiply + XLU sublane reduce;
    # the result is already lane-dense [1, TB].
    q = jnp.sum(hT * w2_ref[...], axis=0, keepdims=True) + b2_ref[...]
    q_ref[...] = q.astype(q_ref.dtype)


def _round_up(x, m):
    return ((x + m - 1) // m) * m


def _choose_batch_tile(B, F, block_b):
    """Pick the batch tile TB.

    - Small batches (B <= 256): one step over the whole batch (per-step
      pipeline overhead dominates anyway).
    - Larger batches: >= 2 grid steps (so v7x's two TensorCores both work),
      a multiple of 128 lanes, capped by block_b and by an ~8 MiB budget for
      the f32 [F, TB] hidden activation (portable to v7x's 64 MiB VMEM).
    """
    if B <= 256:
        return B
    tb = min(block_b, _round_up(pl.cdiv(B, 2), 128))
    f_pad = max(_round_up(F, 8), 8)
    act_budget_bytes = 8 << 20
    tb_cap = max(128, (act_budget_bytes // (f_pad * 4)) // 128 * 128)
    return max(128, min(tb, tb_cap))


def critic_forward(state, action, params, *, block_b=8192):
    """state: [B, state_dim], action: [B, action_dim] -> q: [B, 1] (float32)."""
    w1, b1, w2, b2 = params
    B = state.shape[0]
    F, D = w1.shape
    assert D == state.shape[1] + action.shape[1]

    cdt = w1.dtype
    # One small wrapper pass: concat + transpose to put batch on the lane axis.
    xT = jnp.concatenate([state, action], axis=1).astype(cdt).T  # [D, B]

    TB = _choose_batch_tile(B, F, block_b)
    grid = (pl.cdiv(B, TB),)

    def const(shape):
        return pl.BlockSpec(shape, lambda i: (0, 0))  # resident across steps

    qT = pl.pallas_call(
        _critic_kernel,
        out_shape=jax.ShapeDtypeStruct((1, B), jnp.float32),
        grid=grid,
        in_specs=[
            pl.BlockSpec((D, TB), lambda i: (0, i)),  # lane-dense input tile
            const((F, D)),
            const((F, 1)),
            const((F, 1)),
            const((1, 1)),
        ],
        out_specs=pl.BlockSpec((1, TB), lambda i: (0, i)),  # lane-dense output
        compiler_params=pltpu.CompilerParams(
            dimension_semantics=("parallel",)),
    )(xT, w1, b1, w2, b2)

    return qT.reshape(B, 1)


def init_critic_params(key, state_dim, action_dim, fc_dim, param_dtype=jnp.bfloat16):
    """nn.Linear default init (U[-1/sqrt(fan_in), +1/sqrt(fan_in)]) in
    kernel-friendly layouts:
      w1: [F, state_dim + action_dim] bf16 (PyTorch [out, in] layout)
      b1: [F, 1] f32,  w2: [F, 1] f32 (= W2^T),  b2: [1, 1] f32
    """
    in_dim = state_dim + action_dim
    k1, k2, k3, k4 = jax.random.split(key, 4)
    bound1 = 1.0 / (in_dim ** 0.5)
    bound2 = 1.0 / (fc_dim ** 0.5)
    w1 = jax.random.uniform(k1, (fc_dim, in_dim), jnp.float32, -bound1, bound1)
    b1 = jax.random.uniform(k2, (fc_dim, 1), jnp.float32, -bound1, bound1)
    w2 = jax.random.uniform(k3, (fc_dim, 1), jnp.float32, -bound2, bound2)
    b2 = jax.random.uniform(k4, (1, 1), jnp.float32, -bound2, bound2)
    return (w1.astype(param_dtype), b1, w2, b2)


def _reference(state, action, params):
    """Pure-JAX reference using the same (bf16-rounded) values in f32 math."""
    w1, b1, w2, b2 = params
    x = jnp.concatenate([state.astype(jnp.float32),
                         action.astype(jnp.float32)], axis=1)           # [B, D]
    h = jnp.maximum(x @ w1.astype(jnp.float32).T + b1.reshape(1, -1), 0.0)
    q = (h * w2.reshape(1, -1)).sum(axis=1, keepdims=True) + b2.reshape(1, 1)
    return q


if __name__ == "__main__":
    key = jax.random.PRNGKey(0)
    state_dim, action_dim, fc_dim = 8, 4, 10
    kp, ks, ka, ks2, ka2 = jax.random.split(key, 5)

    params = init_critic_params(kp, state_dim, action_dim, fc_dim)

    # Small batch (single-step grid, full-array blocks).
    B = 2
    state = jax.random.normal(ks, (B, state_dim), jnp.float32).astype(jnp.bfloat16)
    action = jax.random.normal(ka, (B, action_dim), jnp.float32).astype(jnp.bfloat16)
    q = critic_forward(state, action, params)
    jax.block_until_ready(q)
    q_ref = _reference(state, action, params)
    assert q.shape == (B, 1)
    assert jnp.allclose(q, q_ref, atol=1e-3, rtol=1e-3), "mismatch (small batch)"

    # Multi-step grid (exercises lane-dense batch tiling, resident weights,
    # >= 2 grid steps for megacore, partial last tile B % TB != 0).
    B2 = 384
    state2 = jax.random.normal(ks2, (B2, state_dim), jnp.float32).astype(jnp.bfloat16)
    action2 = jax.random.normal(ka2, (B2, action_dim), jnp.float32).astype(jnp.bfloat16)
    q2 = critic_forward(state2, action2, params)
    jax.block_until_ready(q2)
    q2_ref = _reference(state2, action2, params)
    assert q2.shape == (B2, 1)
    assert jnp.allclose(q2, q2_ref, atol=1e-3, rtol=1e-3), "mismatch (tiled batch)"

    print("KERNEL_OK")
</pallas_src>

<mosaic_0001>
module attributes {stable_mosaic.version = 11 : i64} {
  func.func @_critic_kernel(%arg0: i32, %arg1: memref<12x2xbf16, #tpu.memory_space<vmem>>, %arg2: memref<10x12xbf16, #tpu.memory_space<vmem>>, %arg3: memref<10x1xf32, #tpu.memory_space<vmem>>, %arg4: memref<10x1xf32, #tpu.memory_space<vmem>>, %arg5: memref<1x1xf32, #tpu.memory_space<vmem>>, %arg6: memref<1x2xf32, #tpu.memory_space<vmem>>) attributes {dimension_semantics = [#tpu.dimension_semantics<parallel>], iteration_bounds = array<i64: 1>, scalar_prefetch = 0 : i64, scratch_operands = 0 : i64, tpu.core_type = #tpu.core_type<tc>, window_params = [{transform_indices = @transform_0, window_bounds = array<i64: 12, 2>}, {pipeline_mode = #tpu.pipeline_mode<synchronous>, transform_indices = @transform_1, window_bounds = array<i64: 10, 12>}, {pipeline_mode = #tpu.pipeline_mode<synchronous>, transform_indices = @transform_2, window_bounds = array<i64: 10, 1>}, {pipeline_mode = #tpu.pipeline_mode<synchronous>, transform_indices = @transform_3, window_bounds = array<i64: 10, 1>}, {pipeline_mode = #tpu.pipeline_mode<synchronous>, transform_indices = @transform_4, window_bounds = array<i64: 1, 1>}, {transform_indices = @transform_5, window_bounds = array<i64: 1, 2>}]} {
    %c0 = arith.constant 0 : index
    %c0_0 = arith.constant 0 : index
    %0 = vector.load %arg2[%c0, %c0_0] : memref<10x12xbf16, #tpu.memory_space<vmem>>, vector<10x12xbf16>
    %c0_1 = arith.constant 0 : index
    %c0_2 = arith.constant 0 : index
    %1 = vector.load %arg1[%c0_1, %c0_2] : memref<12x2xbf16, #tpu.memory_space<vmem>>, vector<12x2xbf16>
    %cst = arith.constant dense<0.000000e+00> : vector<10x2xf32>
    %2 = tpu.matmul %0, %1, %cst {dimension_numbers = #tpu.dot_dimension_numbers<[1], [0], [0], [1], [0, 0, 1, 1], [], []>} : vector<10x12xbf16>, vector<12x2xbf16>, vector<10x2xf32> -> vector<10x2xf32>
    %c0_3 = arith.constant 0 : index
    %c0_4 = arith.constant 0 : index
    %3 = vector.load %arg3[%c0_3, %c0_4] : memref<10x1xf32, #tpu.memory_space<vmem>>, vector<10x1xf32>
    %4 = vector.broadcast %3 : vector<10x1xf32> to vector<10x2xf32>
    %5 = arith.addf %2, %4 : vector<10x2xf32>
    %cst_5 = arith.constant 0.000000e+00 : f32
    %6 = vector.broadcast %cst_5 : f32 to vector<10x2xf32>
    %7 = arith.maximumf %5, %6 : vector<10x2xf32>
    %c0_6 = arith.constant 0 : index
    %c0_7 = arith.constant 0 : index
    %8 = vector.load %arg4[%c0_6, %c0_7] : memref<10x1xf32, #tpu.memory_space<vmem>>, vector<10x1xf32>
    %9 = vector.broadcast %8 : vector<10x1xf32> to vector<10x2xf32>
    %10 = arith.mulf %7, %9 : vector<10x2xf32>
    %cst_8 = arith.constant dense<0.000000e+00> : vector<2xf32>
    %11 = vector.multi_reduction <add>, %10, %cst_8 [0] : vector<10x2xf32> to vector<2xf32>
    %12 = vector.shape_cast %11 : vector<2xf32> to vector<1x2xf32>
    %c0_9 = arith.constant 0 : index
    %c0_10 = arith.constant 0 : index
    %13 = vector.load %arg5[%c0_9, %c0_10] : memref<1x1xf32, #tpu.memory_space<vmem>>, vector<1x1xf32>
    %14 = vector.broadcast %13 : vector<1x1xf32> to vector<1x2xf32>
    %15 = arith.addf %12, %14 : vector<1x2xf32>
    %c0_11 = arith.constant 0 : index
    %c0_12 = arith.constant 0 : index
    %16 = vector.load %arg6[%c0_11, %c0_12] : memref<1x2xf32, #tpu.memory_space<vmem>>, vector<1x2xf32>
    tpu.vector_store %arg6[%c0_11, %c0_12], %15 {strides = array<i32>} : memref<1x2xf32, #tpu.memory_space<vmem>>, vector<1x2xf32>,
    return
  }
  func.func @transform_0(%arg0: i32) -> (i32, i32) {
    %c0_i32 = arith.constant 0 : i32
    %c0_i32_0 = arith.constant 0 : i32
    return %c0_i32, %arg0 : i32, i32
  }
  func.func @transform_1(%arg0: i32) -> (i32, i32) {
    %c0_i32 = arith.constant 0 : i32
    %c0_i32_0 = arith.constant 0 : i32
    %c0_i32_1 = arith.constant 0 : i32
    return %c0_i32, %c0_i32_0 : i32, i32
  }
  func.func @transform_2(%arg0: i32) -> (i32, i32) {
    %c0_i32 = arith.constant 0 : i32
    %c0_i32_0 = arith.constant 0 : i32
    %c0_i32_1 = arith.constant 0 : i32
    return %c0_i32, %c0_i32_0 : i32, i32
  }
  func.func @transform_3(%arg0: i32) -> (i32, i32) {
    %c0_i32 = arith.constant 0 : i32
    %c0_i32_0 = arith.constant 0 : i32
    %c0_i32_1 = arith.constant 0 : i32
    return %c0_i32, %c0_i32_0 : i32, i32
  }
  func.func @transform_4(%arg0: i32) -> (i32, i32) {
    %c0_i32 = arith.constant 0 : i32
    %c0_i32_0 = arith.constant 0 : i32
    %c0_i32_1 = arith.constant 0 : i32
    return %c0_i32, %c0_i32_0 : i32, i32
  }
  func.func @transform_5(%arg0: i32) -> (i32, i32) {
    %c0_i32 = arith.constant 0 : i32
    %c0_i32_0 = arith.constant 0 : i32
    return %c0_i32, %arg0 : i32, i32
  }
}

</mosaic_0001>

<llo_original>
// kernel: tpu_custom_call.1
$region0: #{tpu_custom_call.1}
  #allocation0 [shape = 'u32[]', space=smem, size = 0x4, offset = 0x4, fixed_abs, tag = 'smem constant byte address 0x4 - core index']
  #allocation1 [shape = 'u32[144,128]{1,0:T(1,128)}', space=vmem, size = 0x12000, scoped, tag = 'internal scratch']
  #allocation2 [shape = 'f32[1,1]{1,0:T(1,128)S(1)}', space=vmem, size = 0x200, scoped, tag = 'scoped memory for tpu_custom_call.1']
  %s0 = inlined_call_operand.vmem [shape: bf16[12,2], index: 0, kind: input, shape index: {}]
  %s1 = inlined_call_operand.vmem [shape: bf16[10,12], index: 1, kind: input, shape index: {}]
  %s2 = inlined_call_operand.vmem [shape: f32[10,1], index: 2, kind: input, shape index: {}]
  %s3 = inlined_call_operand.vmem [shape: f32[10,1], index: 3, kind: input, shape index: {}]
  %s4 = inlined_call_operand.<no memory space> [shape: f32[1,1], index: 4, kind: input, shape index: {}]
  %s5 = inlined_call_operand.hbm [shape: f32[1,2], index: 5, kind: output, shape index: {}]
  %s6 = sld [smem:[#allocation0]]
  $region30: #{tpu_custom_call.1} parent=0
    _
  %s8 = ssub.s32 1, %s6
  %s9 = scalar_select 0, %s8, %s6
  %v10 = vstv %s4
  %11 = vst [vmem:[#allocation2] sm:$0x1] %v10
  $region1: #{tpu_custom_call.1} parent=0
    #allocation3 [shape = 'u8[512]{0}', space=vmem, size = 0x400, scoped, tag = 'output window, operand 0, single buffered']
    #allocation4 [shape = 's32[1]{0}', space=sflag, size = 0x4, scoped, tag = 'scoped memory for tpu_custom_call.1']
    %12 = vsyncpa [#allocation4], 0
    // Predicated region
    $region2: #{tpu_custom_call.1} parent=1 // pred_check
      _
    $region3: #{tpu_custom_call.1} parent=1 // pred_check_branch
      %14 = sbr.rel (0) target = $region5
    $region4: #{tpu_custom_call.1} parent=1 // pred_region
      _
    $region5: #{tpu_custom_call.1} parent=1 // pred_fallthru
      _
    // Predicated region
    $region6: #{tpu_custom_call.1} parent=1 // pred_check
      _
    $region7: #{tpu_custom_call.1} parent=1 // pred_check_branch
      %16 = sbr.rel (0) target = $region9
    $region8: #{tpu_custom_call.1} parent=1 // pred_region
      _
    $region9: #{tpu_custom_call.1} parent=1 // pred_fallthru
      _
    // Predicated region
    $region10: #{tpu_custom_call.1} parent=1 // pred_check
      _
    $region11: #{tpu_custom_call.1} parent=1 // pred_check_branch
      %18 = sbr.rel (0) target = $region13
    $region12: #{tpu_custom_call.1} parent=1 // pred_region
      _
    $region13: #{tpu_custom_call.1} parent=1 // pred_fallthru
      _
    // Predicated region
    $region14: #{tpu_custom_call.1} parent=1 // pred_check
      _
    $region15: #{tpu_custom_call.1} parent=1 // pred_check_branch
      %20 = sbr.rel (0) target = $region17
    $region16: #{tpu_custom_call.1} parent=1 // pred_region
      _
    $region17: #{tpu_custom_call.1} parent=1 // pred_fallthru
      _
    // Predicated region
    $region18: #{tpu_custom_call.1} parent=1 // pred_check
      _
    $region19: #{tpu_custom_call.1} parent=1 // pred_check_branch
      %22 = sbr.rel (0) target = $region21
    $region20: #{tpu_custom_call.1} parent=1 // pred_region
      _
    $region21: #{tpu_custom_call.1} parent=1 // pred_fallthru
      _
    %v24 = vld [vmem:[%s1] sm:$0xf]
    %v25 = vld [vmem:[%s1 + $0x4] sm:$0x1]
    %v26 = vld [vmem:[%s0] sm:$0xf]
    %v27 = vld [vmem:[%s0 + $0x4] sm:$0x3]
    %v28 = vld [vmem:[%s2] sm:$0xff]
    %v29 = vld [vmem:[%s2 + $0x8] sm:$0x3]
    %31 = vset.pattern.permute.xlu0 0
    %32 = vperm.xlu0 %31, %v28
    %v33 = vpop.permute.xlu0 %32
    %36 = vset.pattern.permute.xlu0 0
    %37 = vperm.xlu0 %36, %v29
    %v38 = vpop.permute.xlu0 %37
    %v42 = vunpack.c.l.b16 %v24
    %v43 = vunpack.c.l.b16 %v25
    %v44 = vpack.c.b16 %v43, %v42
    %v47 = vunpack.c.l.b16 %v26
    %v48 = vunpack.c.l.b16 %v27
    %v49 = vpack.c.b16 %v48, %v47
    %vm50 = vcmask 97280
    %v52 = vsel %vm50, %v44, 0
    %vm54 = vcmask 1045504
    %v56 = vsel %vm54, %v49, 0
    %58 = vmatprep.subr.bf16.mxu0 0
    %59 = vmatpush1.bf16.msra.mxu0 %v56
    %60 = vmatprep.subr.bf16.mxu0 0
    %61 = vmatpush1.bf16.msra.mxu0 0
    %62 = vmatprep.subr.bf16.mxu0 0
    %63 = vmatpush1.bf16.msra.mxu0 0
    %64 = vmatprep.subr.bf16.mxu0 0
    %65 = vmatpush1.bf16.msra.mxu0 0
    %66 = vmatprep.subr.bf16.mxu0 0
    %67 = vmatpush1.bf16.msra.mxu0 0
    %68 = vmatprep.subr.bf16.mxu0 0
    %69 = vmatpush1.bf16.msra.mxu0 0
    %70 = vmatprep.subr.bf16.mxu0 0
    %71 = vmatpush1.bf16.msra.mxu0 0
    %72 = vmatprep.subr.bf16.mxu0 0
    %73 = vmatpush1.bf16.msra.mxu0 0
    %74 = vmatprep.subr.bf16.mxu0 0
    %75 = vmatpush1.bf16.msra.mxu0 0
    %76 = vmatprep.subr.bf16.mxu0 0
    %77 = vmatpush1.bf16.msra.mxu0 0
    %78 = vmatprep.subr.bf16.mxu0 0
    %79 = vmatpush1.bf16.msra.mxu0 0
    %80 = vmatprep.subr.bf16.mxu0 0
    %81 = vmatpush1.bf16.msra.mxu0 0
    %82 = vmatprep.subr.bf16.mxu0 0
    %83 = vmatpush1.bf16.msra.mxu0 0
    %84 = vmatprep.subr.bf16.mxu0 0
    %85 = vmatpush1.bf16.msra.mxu0 0
    %86 = vmatprep.subr.bf16.mxu0 0
    %87 = vmatpush1.bf16.msra.mxu0 0
    %88 = vmatprep.subr.bf16.mxu0 0
    %89 = vmatpush1.bf16.msra.mxu0 0
    %90 = vmatprep.mubr.bf16.mxu0 0
    %91 = vmatmul.mubr.bf16.gmra.mrb[0].mxu0 %v52
    %v92 = vpop.f32.mrb[0].mxu0
    %v93 = vadd.f32 %v33, %v92
    %v94 = vpop.f32.mrb[0].mxu0
    %v95 = vpop.f32.mrb[0].mxu0
    %v96 = vadd.f32 %v38, %v95
    %v97 = vpop.f32.mrb[0].mxu0
    %98 = vdwg.mxu0
    %v99 = vmax.f32 %v93, 0.0
    %v100 = vmax.f32 %v96, 0.0
    %v101 = vld [vmem:[%s3] sm:$0xff]
    %v102 = vld [vmem:[%s3 + $0x8] sm:$0x3]
    %104 = vset.pattern.permute.xlu0 0
    %105 = vperm.xlu0 %104, %v101
    %v106 = vpop.permute.xlu0 %105
    %109 = vset.pattern.permute.xlu0 0
    %110 = vperm.xlu0 %109, %v102
    %v111 = vpop.permute.xlu0 %110
    %v113 = vmul.f32 %v99, %v106
    %v114 = vmul.f32 %v100, %v111
    %vm115 = vcmask 15360
    %v116 = vsel %vm115, %v113, 0.0
    %vm117 = vcmask 9216
    %v118 = vsel %vm117, %v114, 0.0
    %v119 = vadd.f32 %v116, %v118
    %v120 = vrot.slane %v119, 4
    %v121 = vadd.f32 %v119, %v120
    %v122 = vrot.slane %v121, 2
    %v123 = vadd.f32 %v121, %v122
    %v124 = vrot.slane %v123, 1
    %v125 = vadd.f32 %v123, %v124
    %v126 = vld [vmem:[#allocation2] sm:$0x1]
    %128 = vset.pattern.permute.xlu0 0
    %129 = vperm.xlu0 %128, %v126
    %v130 = vpop.permute.xlu0 %129
    %v132 = vlaneseq
    %v133 = vshrl.u32 %v132, 7
    %v134 = vsub.s32 0, %v133
    %v135 = vrot.slane %v130, %v134
    %v136 = vadd.f32 %v125, %v135
    %vm137 = vcmask 8192
    %138 = vst.msk [vmem:[#allocation3] sm:$0x1] %vm137, %v136
    // Predicated region
    $region22: #{tpu_custom_call.1} parent=1 // pred_check
      _
    $region23: #{tpu_custom_call.1} parent=1 // pred_check_branch
      %140 = sbr.rel (0) target = $region25
    $region24: #{tpu_custom_call.1} parent=1 // pred_region
      %s142 = ssub.s32 16, 16
      %143 = vsyncadd [#allocation4], %s142
      %s145 = sshll.u32 [#allocation3], 4
      %s146 = int_to_ptr.vmem [resolvable:$true] %s145
      %148 = dma.vmem_to_hbm [thread:$0]  %s146, 16, %s5, [#allocation4]
    $region25: #{tpu_custom_call.1} parent=1 // pred_fallthru
      _
    // Predicated region
    $region26: #{tpu_custom_call.1} parent=1 // pred_check
      _
    $region27: #{tpu_custom_call.1} parent=1 // pred_check_branch
      %150 = sbr.rel (0) target = $region29
    $region28: #{tpu_custom_call.1} parent=1 // pred_region
      %151 = dma.done [#allocation4], 16
    $region29: #{tpu_custom_call.1} parent=1 // pred_fallthru
      _
    %152 = vsyncpa [#allocation4], 1

</llo_original>
